<compile_context>
chip_gen: v7x
topology: tpu7x:2x2x1
jax: 0.10.0
libtpu: 0.0.40
codegen_flags: <defaults>
</compile_context>

<pallas_src>
import math

import jax
import jax.numpy as jnp
from jax.experimental import pallas as pl
from jax.experimental.pallas import tpu as pltpu

LANES = 128


def rezero_kernel(w_ref, x_ref, o_ref):
    # w_ref: (1,) scalar in SMEM; x_ref/o_ref: (TR, 128) VMEM tiles.
    o_ref[...] = x_ref[...] * w_ref[0]


def _target_tile_bytes():
    """Per-generation tile-size target (bytes of x per grid step)."""
    try:
        info = pltpu.get_tpu_info()
        vmem = getattr(info, "vmem_capacity_bytes", None)
        if vmem is not None and vmem <= 64 * 1024 * 1024:
            # v7x: 64 MiB VMEM / 3.2 TB/s HBM — bigger tiles, but keep
            # 2 buffers x (in + out) = 4 x tile well under the 32 MiB scoped
            # VMEM limit.
            return 6 * 1024 * 1024
    except Exception:  # pragma: no cover - info query unavailable
        pass
    # v5e / v6e (128 MiB VMEM): ~4 MiB tiles reach >=85% of HBM roofline.
    return 4 * 1024 * 1024


def rezero(x, resweight, *, tile_bytes=None):
    """ReZero forward: x * resweight (scalar). x: any shape, resweight: (1,)."""
    orig_shape = x.shape
    dtype = x.dtype
    itemsize = jnp.dtype(dtype).itemsize
    # Dtype-aware sublane multiple: 8 rows for 32-bit, 16 for bf16, 32 for
    # int8/fp8 (sub-32-bit dtypes pack along sublanes).
    sub = 8 * max(1, 4 // itemsize)

    total = math.prod(orig_shape) if orig_shape else 1
    rows = pl.cdiv(total, LANES)
    rows_pad = ((rows + sub - 1) // sub) * sub
    pad = rows_pad * LANES - total

    flat = x.reshape(-1)
    if pad:
        # Only ragged shapes pay for this copy; aligned shapes are a pure
        # (free) reshape.
        flat = jnp.pad(flat, (0, pad))
    x2d = flat.reshape(rows_pad, LANES)

    # Row tile: MiB-scale to amortise per-step overhead, rounded to the
    # sublane multiple, capped so the grid has >= 2 steps when possible
    # (lets the row axis shard across both v7x TensorCores).
    if tile_bytes is None:
        tile_bytes = _target_tile_bytes()
    tr = max(sub, tile_bytes // (LANES * itemsize))
    tr = (tr // sub) * sub
    tr = min(tr, rows_pad)
    if rows_pad >= 2 * sub:
        half = ((rows_pad // 2) // sub) * sub
        tr = min(tr, max(sub, half))
    grid = (pl.cdiv(rows_pad, tr),)

    tile_bytes_actual = tr * LANES * itemsize
    vmem_limit = min(32 * 1024 * 1024,
                     max(16 * 1024 * 1024, 4 * tile_bytes_actual + (2 << 20)))

    cost = pl.CostEstimate(
        flops=rows_pad * LANES,
        transcendentals=0,
        bytes_accessed=2 * rows_pad * LANES * itemsize + 4,
    )

    out2d = pl.pallas_call(
        rezero_kernel,
        out_shape=jax.ShapeDtypeStruct((rows_pad, LANES), dtype),
        grid_spec=pltpu.PrefetchScalarGridSpec(
            num_scalar_prefetch=0,
            grid=grid,
            in_specs=[
                # Scalar weight: whole array in SMEM, no double-buffering,
                # zero VMEM cost.
                pl.BlockSpec(memory_space=pltpu.MemorySpace.SMEM),
                # Token slab: large lane-dense tiles, auto-pipelined.
                pl.BlockSpec((tr, LANES), lambda i: (i, 0)),
            ],
            out_specs=pl.BlockSpec((tr, LANES), lambda i: (i, 0)),
        ),
        compiler_params=pltpu.CompilerParams(
            dimension_semantics=("parallel",),
            vmem_limit_bytes=vmem_limit,
        ),
        cost_estimate=cost,
    )(resweight.astype(dtype), x2d)

    out_flat = out2d.reshape(-1)
    if pad:
        out_flat = out_flat[:total]
    return out_flat.reshape(orig_shape)


def reference(x, resweight):
    return x * resweight[0]


if __name__ == "__main__":
    # Shapes consistent with the module: ReZero is shape-agnostic;
    # use batch=2, seq=8, hidden=32 as the primary case.
    B, S, D = 2, 8, 32

    key = jax.random.PRNGKey(0)
    kx, kw = jax.random.split(key, 2)
    x = jax.random.normal(kx, (B, S, D), dtype=jnp.float32)

    # PyTorch init is resweight = 0; also exercise a nonzero value so the
    # multiply is actually checked.
    resweight_init = jnp.array([0.0], dtype=jnp.float32)
    resweight_rand = jax.random.normal(kw, (1,), dtype=jnp.float32)

    out_zero = jax.block_until_ready(rezero(x, resweight_init))
    out_rand = jax.block_until_ready(rezero(x, resweight_rand))
    assert out_zero.shape == (B, S, D)
    assert out_rand.shape == (B, S, D)
    assert jnp.allclose(out_zero, reference(x, resweight_init),
                        atol=1e-6, rtol=1e-6), "mismatch (zero init)"
    assert jnp.allclose(out_rand, reference(x, resweight_rand),
                        atol=1e-6, rtol=1e-6), "mismatch (random weight)"

    # Aligned case (hidden multiple of 128): no pad, no slice — pure reshapes.
    x_aligned = jax.random.normal(kx, (2, 8, 128), dtype=jnp.float32)
    out_al = jax.block_until_ready(rezero(x_aligned, resweight_rand))
    assert jnp.allclose(out_al, reference(x_aligned, resweight_rand),
                        atol=1e-6, rtol=1e-6), "mismatch (aligned shape)"

    # Ragged-size check: total elements not a multiple of 128.
    x_odd = jax.random.normal(kx, (3, 5, 37), dtype=jnp.float32)
    out_odd = jax.block_until_ready(rezero(x_odd, resweight_rand))
    assert jnp.allclose(out_odd, reference(x_odd, resweight_rand),
                        atol=1e-6, rtol=1e-6), "mismatch (ragged shape)"

    # bf16 check: exercises the dtype-aware (16-row) sublane rounding.
    x_bf16 = jax.random.normal(kx, (4, 16, 128), dtype=jnp.float32).astype(jnp.bfloat16)
    out_bf16 = jax.block_until_ready(rezero(x_bf16, resweight_rand))
    ref_bf16 = x_bf16 * resweight_rand.astype(jnp.bfloat16)[0]
    assert jnp.allclose(out_bf16.astype(jnp.float32), ref_bf16.astype(jnp.float32),
                        atol=1e-2, rtol=1e-2), "mismatch (bf16)"

    print("KERNEL_OK")
</pallas_src>

<mosaic_0001>
module attributes {stable_mosaic.version = 11 : i64} {
  func.func @rezero_kernel(%arg0: i32, %arg1: memref<1xf32, #tpu.memory_space<smem>>, %arg2: memref<8x128xf32, #tpu.memory_space<vmem>>, %arg3: memref<8x128xf32, #tpu.memory_space<vmem>>) attributes {dimension_semantics = [#tpu.dimension_semantics<parallel>], iteration_bounds = array<i64: 1>, scalar_prefetch = 0 : i64, scratch_operands = 0 : i64, tpu.core_type = #tpu.core_type<tc>, window_params = [{transform_indices = @transform_0, window_bounds = array<i64: 1>}, {transform_indices = @transform_1, window_bounds = array<i64: 8, 128>}, {transform_indices = @transform_2, window_bounds = array<i64: 8, 128>}]} {
    %c0 = arith.constant 0 : index
    %c0_0 = arith.constant 0 : index
    %0 = vector.load %arg2[%c0, %c0_0] : memref<8x128xf32, #tpu.memory_space<vmem>>, vector<8x128xf32>
    %c0_1 = arith.constant 0 : index
    %1 = memref.load %arg1[%c0_1] : memref<1xf32, #tpu.memory_space<smem>>
    %2 = vector.broadcast %1 : f32 to vector<8x128xf32>
    %3 = arith.mulf %0, %2 : vector<8x128xf32>
    %c0_2 = arith.constant 0 : index
    %c0_3 = arith.constant 0 : index
    %4 = vector.load %arg3[%c0_2, %c0_3] : memref<8x128xf32, #tpu.memory_space<vmem>>, vector<8x128xf32>
    tpu.vector_store %arg3[%c0_2, %c0_3], %3 {strides = array<i32>} : memref<8x128xf32, #tpu.memory_space<vmem>>, vector<8x128xf32>,
    return
  }
  func.func @transform_0(%arg0: i32) -> i32 {
    %c0_i32 = arith.constant 0 : i32
    %c0_i32_0 = arith.constant 0 : i32
    return %c0_i32 : i32
  }
  func.func @transform_1(%arg0: i32) -> (i32, i32) {
    %c0_i32 = arith.constant 0 : i32
    %c0_i32_0 = arith.constant 0 : i32
    return %arg0, %c0_i32 : i32, i32
  }
  func.func @transform_2(%arg0: i32) -> (i32, i32) {
    %c0_i32 = arith.constant 0 : i32
    %c0_i32_0 = arith.constant 0 : i32
    return %arg0, %c0_i32 : i32, i32
  }
}

</mosaic_0001>

<llo_original>
// kernel: tpu_custom_call.1
$region0: #{tpu_custom_call.1}
  #allocation0 [shape = 'u32[]', space=smem, size = 0x4, offset = 0x4, fixed_abs, tag = 'smem constant byte address 0x4 - core index']
  #allocation1 [shape = 'u32[144,128]{1,0:T(1,128)}', space=vmem, size = 0x12000, scoped, tag = 'internal scratch']
  #allocation2 [shape = 'f32[1]{0:T(128)S(6)}', space=smem, size = 0x200, scoped, tag = 'scoped memory for tpu_custom_call.1']
  %s0 = inlined_call_operand.<no memory space> [shape: f32[1], index: 0, kind: input, shape index: {}]
  %s1 = inlined_call_operand.hbm [shape: f32[8,128], index: 1, kind: input, shape index: {}]
  %s2 = inlined_call_operand.hbm [shape: f32[8,128], index: 2, kind: output, shape index: {}]
  %s3 = sld [smem:[#allocation0]]
  $region22: #{tpu_custom_call.1} parent=0
    _
  %s5 = ssub.s32 1, %s3
  %s6 = scalar_select 0, %s5, %s3
  %7 = sst [smem:[#allocation2]] %s0
  $region1: #{tpu_custom_call.1} parent=0
    #allocation3 [shape = 'u8[4096]{0}', space=vmem, size = 0x1000, scoped, tag = 'input window, operand 1, single buffered']
    #allocation4 [shape = 's32[1]{0}', space=sflag, size = 0x4, scoped, tag = 'scoped memory for tpu_custom_call.1']
    #allocation5 [shape = 's32[1]{0}', space=sflag, size = 0x4, scoped, tag = 'scoped memory for tpu_custom_call.1']
    #allocation6 [shape = 'u8[4096]{0}', space=vmem, size = 0x1000, scoped, tag = 'output window, operand 0, single buffered']
    %8 = vsyncpa [#allocation4], 0
    %9 = vsyncpa [#allocation5], 0
    // Predicated region
    $region2: #{tpu_custom_call.1} parent=1 // pred_check
      _
    $region3: #{tpu_custom_call.1} parent=1 // pred_check_branch
      %11 = sbr.rel (0) target = $region5
    $region4: #{tpu_custom_call.1} parent=1 // pred_region
      _
    $region5: #{tpu_custom_call.1} parent=1 // pred_fallthru
      _
    // Predicated region
    $region6: #{tpu_custom_call.1} parent=1 // pred_check
      _
    $region7: #{tpu_custom_call.1} parent=1 // pred_check_branch
      %13 = sbr.rel (0) target = $region9
    $region8: #{tpu_custom_call.1} parent=1 // pred_region
      %s15 = ssub.s32 128, 128
      %16 = vsyncadd [#allocation4], %s15
      %s18 = sshll.u32 [#allocation3], 4
      %s19 = int_to_ptr.vmem [resolvable:$true] %s18
      %21 = dma.hbm_to_vmem [thread:$0]  %s1, 128, %s19, [#allocation4]
    $region9: #{tpu_custom_call.1} parent=1 // pred_fallthru
      _
    // Predicated region
    $region10: #{tpu_custom_call.1} parent=1 // pred_check
      _
    $region11: #{tpu_custom_call.1} parent=1 // pred_check_branch
      %23 = sbr.rel (0) target = $region13
    $region12: #{tpu_custom_call.1} parent=1 // pred_region
      %24 = dma.done [#allocation4], 128
    $region13: #{tpu_custom_call.1} parent=1 // pred_fallthru
      _
    %v25 = vld [vmem:[#allocation3] sm:$0xff]
    %s26 = sld [smem:[#allocation2]]
    %v27 = vstv %s26
    %v28 = vmul.f32 %v25, %v27
    %29 = vst [vmem:[#allocation6] sm:$0xff] %v28
    // Predicated region
    $region14: #{tpu_custom_call.1} parent=1 // pred_check
      _
    $region15: #{tpu_custom_call.1} parent=1 // pred_check_branch
      %31 = sbr.rel (0) target = $region17
    $region16: #{tpu_custom_call.1} parent=1 // pred_region
      %s33 = ssub.s32 128, 128
      %34 = vsyncadd [#allocation5], %s33
      %s36 = sshll.u32 [#allocation6], 4
      %s37 = int_to_ptr.vmem [resolvable:$true] %s36
      %39 = dma.vmem_to_hbm [thread:$0]  %s37, 128, %s2, [#allocation5]
    $region17: #{tpu_custom_call.1} parent=1 // pred_fallthru
      _
    // Predicated region
    $region18: #{tpu_custom_call.1} parent=1 // pred_check
      _
    $region19: #{tpu_custom_call.1} parent=1 // pred_check_branch
      %41 = sbr.rel (0) target = $region21
    $region20: #{tpu_custom_call.1} parent=1 // pred_region
      %42 = dma.done [#allocation5], 128
    $region21: #{tpu_custom_call.1} parent=1 // pred_fallthru
      _
    %43 = vsyncpa [#allocation4], 1
    %44 = vsyncpa [#allocation5], 1

</llo_original>
